<compile_context>
chip_gen: v6e
topology: v6e:2x2x1
jax: 0.10.0
libtpu: 0.0.40
codegen_flags: <defaults>
</compile_context>

<pallas_src>
import numpy as np
import jax
import jax.numpy as jnp
from jax.experimental import pallas as pl
from jax.experimental.pallas import tpu as pltpu

LANE_WIDTH = 512               # lane-dense last dim for flattened slabs
TARGET_TILE_BYTES = 2 << 20    # ~2 MiB of I/O per tile per array (per buffer)


def _mixexp_kernel(params_ref, t_ref, o_ref):
    # params (SMEM, f32[4]): [z, 1-z, -slope0, -slope1]; z = sigmoid(mix[0])
    # is precomputed in the wrapper, slopes are pre-negated.
    z = params_ref[0]
    omz = params_ref[1]
    ns0 = params_ref[2]
    ns1 = params_ref[3]
    t = t_ref[...].astype(jnp.float32)
    out = z * jnp.exp(t * ns0) + omz * jnp.exp(t * ns1)
    o_ref[...] = out.astype(o_ref.dtype)


def _pick_block_rows(rows, cols, itemsize):
    """Rows per block targeting ~TARGET_TILE_BYTES of I/O per tile."""
    br = max(1, TARGET_TILE_BYTES // (cols * itemsize))
    if br >= rows:
        return rows                     # whole slab in one block (small input)
    # Non-full row blocks must have an 8-aligned second-to-last dim.
    return max(8, (br // 8) * 8)


def _run_slab(slab, params, io_dtype):
    rows, cols = slab.shape
    itemsize = jnp.dtype(io_dtype).itemsize
    block_rows = _pick_block_rows(rows, cols, itemsize)
    grid_rows = pl.cdiv(rows, block_rows)   # partial last block handled by Pallas
    return pl.pallas_call(
        _mixexp_kernel,
        out_shape=jax.ShapeDtypeStruct((rows, cols), io_dtype),
        grid_spec=pltpu.PrefetchScalarGridSpec(
            num_scalar_prefetch=0,
            grid=(grid_rows,),
            in_specs=[
                pl.BlockSpec(memory_space=pltpu.SMEM),                # params (4,)
                pl.BlockSpec((block_rows, cols), lambda i: (i, 0)),
            ],
            out_specs=pl.BlockSpec((block_rows, cols), lambda i: (i, 0)),
        ),
        compiler_params=pltpu.CompilerParams(
            dimension_semantics=("parallel",)),
    )(params, slab)


def mix_exp_phi2_fixed_slope(t, mix, slope):
    """phi(t) = sigmoid(mix[0])*exp(-t*slope[0]) + (1-sigmoid(mix[0]))*exp(-t*slope[1])

    t:     arbitrary-shaped float array (times / copula arguments)
    mix:   shape (1,)  float32 learnable log-odds parameter
    slope: shape (2,)  float32 fixed slopes, e.g. [10.0, 1e6]
    """
    orig_shape = t.shape
    io_dtype = t.dtype
    n = int(np.prod(orig_shape)) if len(orig_shape) > 0 else 1

    # Hoist the scalar transcendental out of the kernel; fold the sign into
    # the slopes so the kernel has no per-element negate.
    mix_f32 = mix.astype(jnp.float32)
    slope_f32 = slope.astype(jnp.float32)
    z = jax.nn.sigmoid(mix_f32[0])
    params = jnp.stack([z, 1.0 - z, -slope_f32[0], -slope_f32[1]])

    cols = int(orig_shape[-1]) if len(orig_shape) >= 2 else 0

    if n >= LANE_WIDTH and n % LANE_WIDTH == 0:
        # Zero-copy lane-dense slab (free reshape, unmasked full-width stores).
        slab = t.reshape(-1, LANE_WIDTH)
        out = _run_slab(slab, params, io_dtype)
        return out.reshape(orig_shape)

    if len(orig_shape) >= 2 and cols >= 128 and cols * 4 * 8 <= 4 * TARGET_TILE_BYTES:
        # Zero-copy natural 2-D view: no pad, no output slice; only the row
        # axis is tiled (partial last block masked by Pallas).
        slab = t.reshape(-1, cols)
        out = _run_slab(slab, params, io_dtype)
        return out.reshape(orig_shape)

    # Fallback for awkward shapes (tiny / 1-D / narrow last dim): pad the flat
    # view by at most LANE_WIDTH-1 elements, run lane-dense, slice the tail.
    flat = t.reshape(-1)
    rows = pl.cdiv(n, LANE_WIDTH)
    n_pad = rows * LANE_WIDTH
    if n_pad != n:
        flat = jnp.pad(flat, (0, n_pad - n))
    slab = flat.reshape(rows, LANE_WIDTH)
    out = _run_slab(slab, params, io_dtype)
    flat_out = out.reshape(-1)
    if n_pad != n:
        flat_out = flat_out[:n]
    return flat_out.reshape(orig_shape)


def mix_exp_phi2_fixed_slope_ref(t, mix, slope):
    z = jax.nn.sigmoid(mix.astype(jnp.float32)[0])
    tf = t.astype(jnp.float32)
    out = z * jnp.exp(-tf * slope[0]) + (1.0 - z) * jnp.exp(-tf * slope[1])
    return out.astype(t.dtype)


if __name__ == "__main__":
    # Deterministic parameter init, matching the module's __init__:
    #   self.mix   = Parameter(tensor([log(0.25)]))
    #   self.slope = tensor([10.0, 1e6])
    mix = jnp.array([np.log(0.25)], dtype=jnp.float32)
    slope = jnp.array([10.0, 1.0e6], dtype=jnp.float32)

    key = jax.random.PRNGKey(0)

    # Small input, shape [2, 4, 16, 16]: lane-dense zero-copy path, single block.
    t = jax.random.uniform(key, (2, 4, 16, 16), dtype=jnp.float32,
                           minval=0.0, maxval=1.0)
    out = jax.block_until_ready(mix_exp_phi2_fixed_slope(t, mix, slope))
    ref = mix_exp_phi2_fixed_slope_ref(t, mix, slope)
    np.testing.assert_allclose(np.asarray(out), np.asarray(ref),
                               rtol=1e-6, atol=1e-6)

    # Tiny awkward shape: exercises the padded-fallback path.
    key2 = jax.random.PRNGKey(1)
    t2 = jax.random.uniform(key2, (3, 5, 7), dtype=jnp.float32,
                            minval=0.0, maxval=1.0)
    out2 = jax.block_until_ready(mix_exp_phi2_fixed_slope(t2, mix, slope))
    ref2 = mix_exp_phi2_fixed_slope_ref(t2, mix, slope)
    np.testing.assert_allclose(np.asarray(out2), np.asarray(ref2),
                               rtol=1e-6, atol=1e-6)

    # Lane-unaligned 2-D input: natural-view zero-copy path (no pad/slice).
    key3 = jax.random.PRNGKey(2)
    t3 = jax.random.uniform(key3, (600, 700), dtype=jnp.float32,
                            minval=0.0, maxval=1.0)
    out3 = jax.block_until_ready(mix_exp_phi2_fixed_slope(t3, mix, slope))
    ref3 = mix_exp_phi2_fixed_slope_ref(t3, mix, slope)
    np.testing.assert_allclose(np.asarray(out3), np.asarray(ref3),
                               rtol=1e-6, atol=1e-6)

    # Larger unaligned 2-D input: multi-block tiled path with a masked partial
    # last row block (verifies edge-block writeback masking).
    key4 = jax.random.PRNGKey(3)
    t4 = jax.random.uniform(key4, (2048, 700), dtype=jnp.float32,
                            minval=0.0, maxval=1.0)
    out4 = jax.block_until_ready(mix_exp_phi2_fixed_slope(t4, mix, slope))
    ref4 = mix_exp_phi2_fixed_slope_ref(t4, mix, slope)
    np.testing.assert_allclose(np.asarray(out4), np.asarray(ref4),
                               rtol=1e-6, atol=1e-6)

    print("KERNEL_OK")
</pallas_src>

<mosaic_0001>
module attributes {stable_mosaic.version = 11 : i64} {
  func.func @_mixexp_kernel(%arg0: i32, %arg1: memref<4xf32, #tpu.memory_space<smem>>, %arg2: memref<4x512xf32, #tpu.memory_space<vmem>>, %arg3: memref<4x512xf32, #tpu.memory_space<vmem>>) attributes {dimension_semantics = [#tpu.dimension_semantics<parallel>], iteration_bounds = array<i64: 1>, scalar_prefetch = 0 : i64, scratch_operands = 0 : i64, tpu.core_type = #tpu.core_type<tc>, window_params = [{transform_indices = @transform_0, window_bounds = array<i64: 4>}, {transform_indices = @transform_1, window_bounds = array<i64: 4, 512>}, {transform_indices = @transform_2, window_bounds = array<i64: 4, 512>}]} {
    %c0 = arith.constant 0 : index
    %0 = memref.load %arg1[%c0] : memref<4xf32, #tpu.memory_space<smem>>
    %c1 = arith.constant 1 : index
    %1 = memref.load %arg1[%c1] : memref<4xf32, #tpu.memory_space<smem>>
    %c2 = arith.constant 2 : index
    %2 = memref.load %arg1[%c2] : memref<4xf32, #tpu.memory_space<smem>>
    %c3 = arith.constant 3 : index
    %3 = memref.load %arg1[%c3] : memref<4xf32, #tpu.memory_space<smem>>
    %c0_0 = arith.constant 0 : index
    %c0_1 = arith.constant 0 : index
    %4 = vector.load %arg2[%c0_0, %c0_1] : memref<4x512xf32, #tpu.memory_space<vmem>>, vector<4x512xf32>
    %5 = vector.broadcast %2 : f32 to vector<4x512xf32>
    %6 = arith.mulf %4, %5 : vector<4x512xf32>
    %7 = math.exp %6 : vector<4x512xf32>
    %8 = vector.broadcast %0 : f32 to vector<4x512xf32>
    %9 = arith.mulf %8, %7 : vector<4x512xf32>
    %10 = vector.broadcast %3 : f32 to vector<4x512xf32>
    %11 = arith.mulf %4, %10 : vector<4x512xf32>
    %12 = math.exp %11 : vector<4x512xf32>
    %13 = vector.broadcast %1 : f32 to vector<4x512xf32>
    %14 = arith.mulf %13, %12 : vector<4x512xf32>
    %15 = arith.addf %9, %14 : vector<4x512xf32>
    %c0_2 = arith.constant 0 : index
    %c0_3 = arith.constant 0 : index
    %16 = vector.load %arg3[%c0_2, %c0_3] : memref<4x512xf32, #tpu.memory_space<vmem>>, vector<4x512xf32>
    tpu.vector_store %arg3[%c0_2, %c0_3], %15 {strides = array<i32>} : memref<4x512xf32, #tpu.memory_space<vmem>>, vector<4x512xf32>,
    return
  }
  func.func @transform_0(%arg0: i32) -> i32 {
    %c0_i32 = arith.constant 0 : i32
    %c0_i32_0 = arith.constant 0 : i32
    return %c0_i32 : i32
  }
  func.func @transform_1(%arg0: i32) -> (i32, i32) {
    %c0_i32 = arith.constant 0 : i32
    %c0_i32_0 = arith.constant 0 : i32
    return %arg0, %c0_i32 : i32, i32
  }
  func.func @transform_2(%arg0: i32) -> (i32, i32) {
    %c0_i32 = arith.constant 0 : i32
    %c0_i32_0 = arith.constant 0 : i32
    return %arg0, %c0_i32 : i32, i32
  }
}

</mosaic_0001>

<llo_original>
// kernel: tpu_custom_call.1
$region0: #{tpu_custom_call.1}
  #allocation0 [shape = 'u32[]', space=smem, size = 0x4, offset = 0x4, fixed_abs, tag = 'smem constant byte address 0x4 - core index']
  #allocation1 [shape = 'u32[144,128]{1,0:T(1,128)}', space=vmem, size = 0x12000, scoped, tag = 'internal scratch']
  %s0 = inlined_call_operand.hbm [shape: f32[4], index: 0, kind: input, shape index: {}]
  %s1 = inlined_call_operand.hbm [shape: f32[4,512], index: 1, kind: input, shape index: {}]
  %s2 = inlined_call_operand.hbm [shape: f32[4,512], index: 2, kind: output, shape index: {}]
  %s3 = sld [smem:[#allocation0]]
  $region26: #{tpu_custom_call.1} parent=0
    _
  %s5 = ssub.s32 1, %s3
  %s6 = scalar_select 0, %s5, %s3
  $region1: #{tpu_custom_call.1} parent=0
    #allocation2 [shape = 'u8[512]{0}', space=smem, size = 0x200, scoped, tag = 'input window, operand 0, single buffered']
    #allocation3 [shape = 's32[1]{0}', space=sflag, size = 0x4, scoped, tag = 'scoped memory for tpu_custom_call.1']
    #allocation4 [shape = 's32[1]{0}', space=sflag, size = 0x4, scoped, tag = 'scoped memory for tpu_custom_call.1']
    #allocation5 [shape = 's32[1]{0}', space=sflag, size = 0x4, scoped, tag = 'scoped memory for tpu_custom_call.1']
    #allocation6 [shape = 'u8[8192]{0}', space=vmem, size = 0x2000, scoped, tag = 'input window, operand 1, single buffered']
    #allocation7 [shape = 'u8[8192]{0}', space=vmem, size = 0x2000, scoped, tag = 'output window, operand 0, single buffered']
    %7 = vsyncpa [#allocation5], 0
    %8 = vsyncpa [#allocation3], 0
    %9 = vsyncpa [#allocation4], 0
    // Predicated region
    $region2: #{tpu_custom_call.1} parent=1 // pred_check
      _
    $region3: #{tpu_custom_call.1} parent=1 // pred_check_branch
      %11 = sbr.rel (0) target = $region5
    $region4: #{tpu_custom_call.1} parent=1 // pred_region
      %s13 = ssub.s32 16, 16
      %14 = vsyncadd [#allocation5], %s13
      %17 = dma.hbm_to_smem %s0, 16, [#allocation2], [#allocation5]
    $region5: #{tpu_custom_call.1} parent=1 // pred_fallthru
      _
    // Predicated region
    $region6: #{tpu_custom_call.1} parent=1 // pred_check
      _
    $region7: #{tpu_custom_call.1} parent=1 // pred_check_branch
      %19 = sbr.rel (0) target = $region9
    $region8: #{tpu_custom_call.1} parent=1 // pred_region
      %s21 = ssub.s32 256, 256
      %22 = vsyncadd [#allocation3], %s21
      %s24 = sshll.u32 [#allocation6], 4
      %s25 = int_to_ptr.vmem [resolvable:$true] %s24
      %27 = dma.hbm_to_vmem [thread:$0]  %s1, 256, %s25, [#allocation3]
    $region9: #{tpu_custom_call.1} parent=1 // pred_fallthru
      _
    // Predicated region
    $region10: #{tpu_custom_call.1} parent=1 // pred_check
      _
    $region11: #{tpu_custom_call.1} parent=1 // pred_check_branch
      %29 = sbr.rel (0) target = $region13
    $region12: #{tpu_custom_call.1} parent=1 // pred_region
      %30 = dma.done [#allocation5], 16
    $region13: #{tpu_custom_call.1} parent=1 // pred_fallthru
      _
    // Predicated region
    $region14: #{tpu_custom_call.1} parent=1 // pred_check
      _
    $region15: #{tpu_custom_call.1} parent=1 // pred_check_branch
      %32 = sbr.rel (0) target = $region17
    $region16: #{tpu_custom_call.1} parent=1 // pred_region
      %33 = dma.done [#allocation3], 256
    $region17: #{tpu_custom_call.1} parent=1 // pred_fallthru
      _
    %34 = sfence
    %s35 = sld [smem:[#allocation2]]
    %s36 = sld [smem:[#allocation2 + $0x1]]
    %s37 = sld [smem:[#allocation2 + $0x2]]
    %s38 = sld [smem:[#allocation2 + $0x3]]
    %v39 = vld [vmem:[#allocation6] sm:$0xff]
    %v40 = vld [vmem:[#allocation6 + $0x8] sm:$0xff]
    %v41 = vstv %s37
    %v42 = vmul.f32 %v39, %v41
    %v43 = vmul.f32 %v40, %v41
    %v44 = vmul.f32 %v42, 1.442695
    %v45 = vpow.pop %v44
    %v46 = vmul.f32 %v43, 1.442695
    %v47 = vpow.pop %v46
    %v48 = vstv %s35
    %v49 = vmul.f32 %v48, %v45
    %v50 = vmul.f32 %v48, %v47
    %v51 = vstv %s38
    %v52 = vmul.f32 %v39, %v51
    %v53 = vmul.f32 %v40, %v51
    %v54 = vmul.f32 %v52, 1.442695
    %v55 = vpow.pop %v54
    %v56 = vmul.f32 %v53, 1.442695
    %v57 = vpow.pop %v56
    %v58 = vstv %s36
    %v59 = vmul.f32 %v58, %v55
    %v60 = vmul.f32 %v58, %v57
    %v61 = vadd.f32 %v49, %v59
    %v62 = vadd.f32 %v50, %v60
    %63 = vst [vmem:[#allocation7] sm:$0xff] %v61
    %64 = vst [vmem:[#allocation7 + $0x8] sm:$0xff] %v62
    // Predicated region
    $region18: #{tpu_custom_call.1} parent=1 // pred_check
      _
    $region19: #{tpu_custom_call.1} parent=1 // pred_check_branch
      %66 = sbr.rel (0) target = $region21
    $region20: #{tpu_custom_call.1} parent=1 // pred_region
      %s68 = ssub.s32 256, 256
      %69 = vsyncadd [#allocation4], %s68
      %s71 = sshll.u32 [#allocation7], 4
      %s72 = int_to_ptr.vmem [resolvable:$true] %s71
      %74 = dma.vmem_to_hbm [thread:$0]  %s72, 256, %s2, [#allocation4]
    $region21: #{tpu_custom_call.1} parent=1 // pred_fallthru
      _
    // Predicated region
    $region22: #{tpu_custom_call.1} parent=1 // pred_check
      _
    $region23: #{tpu_custom_call.1} parent=1 // pred_check_branch
      %76 = sbr.rel (0) target = $region25
    $region24: #{tpu_custom_call.1} parent=1 // pred_region
      %77 = dma.done [#allocation4], 256
    $region25: #{tpu_custom_call.1} parent=1 // pred_fallthru
      _
    %78 = vsyncpa [#allocation3], 1
    %79 = vsyncpa [#allocation4], 1
    %80 = vsyncpa [#allocation5], 1

</llo_original>
